<compile_context>
chip_gen: v7x
topology: tpu7x:2x2x1
jax: 0.10.0
libtpu: 0.0.40
codegen_flags: <defaults>
</compile_context>

<pallas_src>
import numpy as np
import jax
import jax.numpy as jnp
from jax.experimental import pallas as pl
from jax.experimental.pallas import tpu as pltpu


def _round_up(x, m):
    return ((x + m - 1) // m) * m


def _vmem_capacity_bytes():
    """Best-effort query of per-core VMEM capacity; conservative fallback."""
    try:
        info = pltpu.get_tpu_info()
        cap = getattr(info, "vmem_capacity_bytes", None)
        if cap:
            return int(cap)
    except Exception:
        pass
    return 64 * 1024 * 1024  # assume the smaller (v7x-like) part if unknown


def _mm_bias_kernel(x_ref, wt_ref, bias_ref, o_ref):
    # Full-K path: one MXU matmul per (i, j) tile, no accumulator round-trip.
    # x_ref:    (tm, K_pad)  modulated activations (compute dtype)
    # wt_ref:   (K_pad, tn)  shared weight, pre-transposed (in_f, out_f) layout
    # bias_ref: (1, tn)      shared output bias (f32)
    # o_ref:    (tm, tn)
    o_ref[...] = (jnp.dot(x_ref[...], wt_ref[...],
                          preferred_element_type=jnp.float32)
                  + bias_ref[...]).astype(o_ref.dtype)


def _mm_bias_acc_kernel(x_ref, wt_ref, bias_ref, o_ref, acc_ref):
    # K-tiled fallback for very large in_f: f32 VMEM accumulator resident
    # across the (innermost, "arbitrary") K axis.
    k = pl.program_id(2)

    @pl.when(k == 0)
    def _init():
        acc_ref[...] = jnp.zeros_like(acc_ref)

    acc_ref[...] += jnp.dot(x_ref[...], wt_ref[...],
                            preferred_element_type=jnp.float32)

    @pl.when(k == pl.num_programs(2) - 1)
    def _finalize():
        o_ref[...] = (acc_ref[...] + bias_ref[...]).astype(o_ref.dtype)


def mod_linear(x, z, params, *, compute_dtype=jnp.bfloat16,
               tm_max=512, tn_max=512):
    """x: (B, ..., in_f), z: (B, ..., style_f). Returns (*x.shape[:-1], out_f).

    compute_dtype: dtype of the hot matmul operands (default bfloat16 -> MXU
    native rate, half the HBM/VMEM bytes).  Modulation math and accumulation
    stay float32.  Pass jnp.float32 for a tight-tolerance path.
    """
    w = params["weight"]           # (out_f, in_f)
    bias = params["bias"]          # (out_f,)
    wa = params["weight_alpha"]    # (in_f, style_f)
    ba = params["bias_alpha"]      # (in_f,)
    wb = params["weight_beta"]     # (in_f, style_f)
    bb = params["bias_beta"]       # (in_f,)

    x_shape = x.shape
    B = x_shape[0]
    in_f = x_shape[-1]
    out_f = w.shape[0]

    x3 = x.reshape(B, -1, in_f).astype(jnp.float32)       # (B, M, in_f)
    # torch reference reshapes z to (B, 1, style_f): middle dims must be size 1.
    z2 = z.reshape(B, -1, z.shape[-1])
    if z2.shape[1] != 1:
        raise ValueError(
            "ModLinear expects z middle dims to collapse to size 1, got "
            f"{z.shape}")
    z2 = z2[:, 0, :].astype(jnp.float32)                   # (B, style_f)
    M = x3.shape[1]
    Mtot = B * M

    # Hoisted modulation: two batched full-row GEMMs at full MXU occupancy.
    alpha = jnp.dot(z2, wa.T, preferred_element_type=jnp.float32) + ba   # (B, in_f)
    beta = jnp.dot(z2, wb.T, preferred_element_type=jnp.float32) + bb    # (B, in_f)

    # Fold modulation into the activations in the wrapper (one fused elementwise),
    # then collapse batch into M so the kernel is a single large GEMM and the
    # weight is streamed from HBM only once.
    x_mod = (x3 + beta[:, None, :]) * alpha[:, None, :]                  # f32
    x_mod = x_mod.reshape(Mtot, in_f).astype(compute_dtype)

    # One-time weight transpose + cast in the wrapper (no in-kernel transpose).
    w_t = w.T.astype(compute_dtype)                        # (in_f, out_f)

    # Per-generation sizing: v7x has 64 MiB VMEM/TC, v5e/v6e have 128 MiB.
    vmem = _vmem_capacity_bytes()
    if vmem >= 96 * 1024 * 1024:
        tk_cap = 2048
        vmem_limit = 96 * 1024 * 1024
    else:
        tk_cap = 1024
        vmem_limit = 44 * 1024 * 1024

    # Tile sizes: lane-dense N (multiple of 128 -> unmasked vst), sublane M.
    tm = min(tm_max, _round_up(Mtot, 8))
    tn = min(tn_max, _round_up(out_f, 128))
    M_pad = _round_up(Mtot, tm)
    N_pad = _round_up(out_f, tn)
    K128 = _round_up(in_f, 128)

    biasp = jnp.pad(bias.astype(jnp.float32),
                    (0, N_pad - out_f)).reshape(1, N_pad)

    if K128 <= tk_cap:
        # ---- Full-K path: grid (M_tiles, N_tiles), no reduction axis. ----
        K_pad = K128
        xp = jnp.pad(x_mod, ((0, M_pad - Mtot), (0, K_pad - in_f)))
        wp = jnp.pad(w_t, ((0, K_pad - in_f), (0, N_pad - out_f)))
        grid = (M_pad // tm, N_pad // tn)

        out = pl.pallas_call(
            _mm_bias_kernel,
            out_shape=jax.ShapeDtypeStruct((M_pad, N_pad), x.dtype),
            grid_spec=pltpu.PrefetchScalarGridSpec(
                num_scalar_prefetch=0,
                grid=grid,
                in_specs=[
                    pl.BlockSpec((tm, K_pad), lambda i, j: (i, 0)),
                    pl.BlockSpec((K_pad, tn), lambda i, j: (0, j)),
                    pl.BlockSpec((1, tn), lambda i, j: (0, j)),
                ],
                out_specs=pl.BlockSpec((tm, tn), lambda i, j: (i, j)),
            ),
            compiler_params=pltpu.CompilerParams(
                dimension_semantics=("parallel", "parallel"),
                vmem_limit_bytes=vmem_limit,
            ),
        )(xp, wp, biasp)
    else:
        # ---- K-tiled fallback for very large in_f. ----
        tk = tk_cap
        K_pad = _round_up(in_f, tk)
        xp = jnp.pad(x_mod, ((0, M_pad - Mtot), (0, K_pad - in_f)))
        wp = jnp.pad(w_t, ((0, K_pad - in_f), (0, N_pad - out_f)))
        grid = (M_pad // tm, N_pad // tn, K_pad // tk)

        out = pl.pallas_call(
            _mm_bias_acc_kernel,
            out_shape=jax.ShapeDtypeStruct((M_pad, N_pad), x.dtype),
            grid_spec=pltpu.PrefetchScalarGridSpec(
                num_scalar_prefetch=0,
                grid=grid,
                in_specs=[
                    pl.BlockSpec((tm, tk), lambda i, j, k: (i, k)),
                    pl.BlockSpec((tk, tn), lambda i, j, k: (k, j)),
                    pl.BlockSpec((1, tn), lambda i, j, k: (0, j)),
                ],
                out_specs=pl.BlockSpec((tm, tn), lambda i, j, k: (i, j)),
                scratch_shapes=[pltpu.VMEM((tm, tn), jnp.float32)],
            ),
            compiler_params=pltpu.CompilerParams(
                dimension_semantics=("parallel", "parallel", "arbitrary"),
                vmem_limit_bytes=vmem_limit,
            ),
        )(xp, wp, biasp)

    out = out[:Mtot, :out_f].reshape(B, M, out_f)
    return out.reshape(*x_shape[:-1], out_f)


def init_params(key, in_features, out_features, style_features,
                weight_gain=1.0, bias_init=0.0):
    """Deterministic synthetic init mirroring ModLinear.__init__ shapes."""
    k1, k2, k3 = jax.random.split(key, 3)
    wg = weight_gain / np.sqrt(in_features)
    return {
        "weight": jax.random.normal(k1, (out_features, in_features),
                                    jnp.float32) * wg,
        "bias": jnp.full((out_features,), np.float32(bias_init)),
        "weight_alpha": jax.random.normal(k2, (in_features, style_features),
                                          jnp.float32) / np.sqrt(style_features),
        "bias_alpha": jnp.ones((in_features,), jnp.float32),
        "weight_beta": jax.random.normal(k3, (in_features, style_features),
                                         jnp.float32) / np.sqrt(style_features),
        "bias_beta": jnp.zeros((in_features,), jnp.float32),
    }


def mod_linear_ref(x, z, params):
    """Pure-JAX reference mirroring the PyTorch forward (default flags)."""
    w, bias = params["weight"], params["bias"]
    wa, ba = params["weight_alpha"], params["bias_alpha"]
    wb, bb = params["weight_beta"], params["bias_beta"]
    x_shape = x.shape
    B, in_f = x_shape[0], x_shape[-1]
    x3 = x.reshape(B, -1, in_f)
    z3 = z.reshape(B, 1, z.shape[-1])
    alpha = jnp.einsum("bns,is->bni", z3, wa) + ba
    beta = jnp.einsum("bns,is->bni", z3, wb) + bb
    w_mod = w[None] * alpha                       # (B, out_f, in_f)
    x3 = x3 + beta
    out = jnp.einsum("bmi,boi->bmo", x3, w_mod) + bias[None, None, :]
    return out.reshape(*x_shape[:-1], out.shape[-1])


if __name__ == "__main__":
    B, H, W = 2, 4, 4          # x leading dims (B, H, W, in_f) -> M = H*W = 16
    in_features = 32
    out_features = 48
    style_features = 16

    key = jax.random.PRNGKey(0)
    kp, kx, kz = jax.random.split(key, 3)
    params = init_params(kp, in_features, out_features, style_features)

    x = jax.random.normal(kx, (B, H, W, in_features), jnp.float32)
    z = jax.random.normal(kz, (B, style_features), jnp.float32)

    ref = mod_linear_ref(x, z, params)

    # Tight-tolerance check with f32 operands.
    out_f32 = jax.block_until_ready(
        mod_linear(x, z, params, compute_dtype=jnp.float32))
    assert out_f32.shape == (B, H, W, out_features)
    assert jnp.allclose(out_f32, ref, atol=3e-4, rtol=3e-4)

    # Default (bf16 operands, f32 accumulation) fast path — looser tolerance.
    out_bf16 = jax.block_until_ready(mod_linear(x, z, params))
    assert out_bf16.shape == (B, H, W, out_features)
    assert jnp.allclose(out_bf16, ref, atol=5e-2, rtol=5e-2)

    print("KERNEL_OK")
</pallas_src>

<mosaic_0001>
module attributes {stable_mosaic.version = 11 : i64} {
  func.func @_mm_bias_kernel(%arg0: i32, %arg1: i32, %arg2: memref<32x128xf32, #tpu.memory_space<vmem>>, %arg3: memref<128x128xf32, #tpu.memory_space<vmem>>, %arg4: memref<1x128xf32, #tpu.memory_space<vmem>>, %arg5: memref<32x128xf32, #tpu.memory_space<vmem>>) attributes {dimension_semantics = [#tpu.dimension_semantics<parallel>, #tpu.dimension_semantics<parallel>], iteration_bounds = array<i64: 1, 1>, scalar_prefetch = 0 : i64, scratch_operands = 0 : i64, tpu.core_type = #tpu.core_type<tc>, window_params = [{transform_indices = @transform_0, window_bounds = array<i64: 32, 128>}, {transform_indices = @transform_1, window_bounds = array<i64: 128, 128>}, {transform_indices = @transform_2, window_bounds = array<i64: 1, 128>}, {transform_indices = @transform_3, window_bounds = array<i64: 32, 128>}]} {
    %c0 = arith.constant 0 : index
    %c0_0 = arith.constant 0 : index
    %0 = vector.load %arg2[%c0, %c0_0] : memref<32x128xf32, #tpu.memory_space<vmem>>, vector<32x128xf32>
    %c0_1 = arith.constant 0 : index
    %c0_2 = arith.constant 0 : index
    %1 = vector.load %arg3[%c0_1, %c0_2] : memref<128x128xf32, #tpu.memory_space<vmem>>, vector<128x128xf32>
    %cst = arith.constant dense<0.000000e+00> : vector<32x128xf32>
    %2 = tpu.matmul %0, %1, %cst {dimension_numbers = #tpu.dot_dimension_numbers<[1], [0], [0], [1], [0, 0, 1, 1], [], []>} : vector<32x128xf32>, vector<128x128xf32>, vector<32x128xf32> -> vector<32x128xf32>
    %c0_3 = arith.constant 0 : index
    %c0_4 = arith.constant 0 : index
    %3 = vector.load %arg4[%c0_3, %c0_4] : memref<1x128xf32, #tpu.memory_space<vmem>>, vector<1x128xf32>
    %4 = vector.broadcast %3 : vector<1x128xf32> to vector<32x128xf32>
    %5 = arith.addf %2, %4 : vector<32x128xf32>
    %c0_5 = arith.constant 0 : index
    %c0_6 = arith.constant 0 : index
    %6 = vector.load %arg5[%c0_5, %c0_6] : memref<32x128xf32, #tpu.memory_space<vmem>>, vector<32x128xf32>
    tpu.vector_store %arg5[%c0_5, %c0_6], %5 {strides = array<i32>} : memref<32x128xf32, #tpu.memory_space<vmem>>, vector<32x128xf32>,
    return
  }
  func.func @transform_0(%arg0: i32, %arg1: i32) -> (i32, i32) {
    %c0_i32 = arith.constant 0 : i32
    %c0_i32_0 = arith.constant 0 : i32
    return %arg0, %c0_i32 : i32, i32
  }
  func.func @transform_1(%arg0: i32, %arg1: i32) -> (i32, i32) {
    %c0_i32 = arith.constant 0 : i32
    %c0_i32_0 = arith.constant 0 : i32
    return %c0_i32, %arg1 : i32, i32
  }
  func.func @transform_2(%arg0: i32, %arg1: i32) -> (i32, i32) {
    %c0_i32 = arith.constant 0 : i32
    %c0_i32_0 = arith.constant 0 : i32
    return %c0_i32, %arg1 : i32, i32
  }
  func.func @transform_3(%arg0: i32, %arg1: i32) -> (i32, i32) {
    %c0_i32 = arith.constant 0 : i32
    return %arg0, %arg1 : i32, i32
  }
}

</mosaic_0001>

<llo_original>
// kernel: tpu_custom_call.1
$region0: #{tpu_custom_call.1}
  #allocation0 [shape = 'u32[]', space=smem, size = 0x4, offset = 0x4, fixed_abs, tag = 'smem constant byte address 0x4 - core index']
  #allocation1 [shape = 'u32[144,128]{1,0:T(1,128)}', space=vmem, size = 0x12000, scoped, tag = 'internal scratch']
  %s0 = inlined_call_operand.hbm [shape: f32[32,128], index: 0, kind: input, shape index: {}]
  %s1 = inlined_call_operand.hbm [shape: f32[128,128], index: 1, kind: input, shape index: {}]
  %s2 = inlined_call_operand.vmem [shape: f32[1,128], index: 2, kind: input, shape index: {}]
  %s3 = inlined_call_operand.hbm [shape: f32[32,128], index: 3, kind: output, shape index: {}]
  %s4 = sld [smem:[#allocation0]]
  $region30: #{tpu_custom_call.1} parent=0
    _
  %s6 = ssub.s32 1, %s4
  %s7 = scalar_select 0, %s6, %s4
  $region1: #{tpu_custom_call.1} parent=0
    #allocation2 [shape = 'u8[16384]{0}', space=vmem, size = 0x4000, scoped, tag = 'input window, operand 0, single buffered']
    #allocation3 [shape = 's32[1]{0}', space=sflag, size = 0x4, scoped, tag = 'scoped memory for tpu_custom_call.1']
    #allocation4 [shape = 's32[1]{0}', space=sflag, size = 0x4, scoped, tag = 'scoped memory for tpu_custom_call.1']
    #allocation5 [shape = 'u8[65536]{0}', space=vmem, size = 0x10000, scoped, tag = 'input window, operand 1, single buffered']
    #allocation6 [shape = 's32[1]{0}', space=sflag, size = 0x4, scoped, tag = 'scoped memory for tpu_custom_call.1']
    #allocation7 [shape = 'u8[16384]{0}', space=vmem, size = 0x4000, scoped, tag = 'output window, operand 0, single buffered']
    %8 = vsyncpa [#allocation3], 0
    %9 = vsyncpa [#allocation6], 0
    %10 = vsyncpa [#allocation4], 0
    // Predicated region
    $region2: #{tpu_custom_call.1} parent=1 // pred_check
      _
    $region3: #{tpu_custom_call.1} parent=1 // pred_check_branch
      %12 = sbr.rel (0) target = $region5
    $region4: #{tpu_custom_call.1} parent=1 // pred_region
      %s14 = ssub.s32 512, 512
      %15 = vsyncadd [#allocation3], %s14
      %s16 = sshll.u32 [#allocation2], 4
      %s17 = int_to_ptr.vmem [resolvable:$true] %s16
      %22 = dma.hbm_to_vmem [thread:$0]  %s0, 512, %s17, [#allocation3], 128, 128, 8
    $region5: #{tpu_custom_call.1} parent=1 // pred_fallthru
      _
    // Predicated region
    $region6: #{tpu_custom_call.1} parent=1 // pred_check
      _
    $region7: #{tpu_custom_call.1} parent=1 // pred_check_branch
      %24 = sbr.rel (0) target = $region9
    $region8: #{tpu_custom_call.1} parent=1 // pred_region
      %s26 = ssub.s32 2048, 2048
      %27 = vsyncadd [#allocation6], %s26
      %s28 = sshll.u32 [#allocation5], 4
      %s29 = int_to_ptr.vmem [resolvable:$true] %s28
      %34 = dma.hbm_to_vmem [thread:$0]  %s1, 2048, %s29, [#allocation6], 128, 128, 8
    $region9: #{tpu_custom_call.1} parent=1 // pred_fallthru
      _
    // Predicated region
    $region10: #{tpu_custom_call.1} parent=1 // pred_check
      _
    $region11: #{tpu_custom_call.1} parent=1 // pred_check_branch
      %36 = sbr.rel (0) target = $region13
    $region12: #{tpu_custom_call.1} parent=1 // pred_region
      _
    $region13: #{tpu_custom_call.1} parent=1 // pred_fallthru
      _
    // Predicated region
    $region14: #{tpu_custom_call.1} parent=1 // pred_check
      _
    $region15: #{tpu_custom_call.1} parent=1 // pred_check_branch
      %38 = sbr.rel (0) target = $region17
    $region16: #{tpu_custom_call.1} parent=1 // pred_region
      %39 = dma.done [#allocation3], 512
    $region17: #{tpu_custom_call.1} parent=1 // pred_fallthru
      _
    // Predicated region
    $region18: #{tpu_custom_call.1} parent=1 // pred_check
      _
    $region19: #{tpu_custom_call.1} parent=1 // pred_check_branch
      %41 = sbr.rel (0) target = $region21
    $region20: #{tpu_custom_call.1} parent=1 // pred_region
      %42 = dma.done [#allocation6], 2048
    $region21: #{tpu_custom_call.1} parent=1 // pred_fallthru
      _
    %v43 = vld [vmem:[#allocation2] sm:$0xff]
    %v44 = vld [vmem:[#allocation2 + $0x8] sm:$0xff]
    %v45 = vld [vmem:[#allocation2 + $0x10] sm:$0xff]
    %v46 = vld [vmem:[#allocation2 + $0x18] sm:$0xff]
    %v47 = vld [vmem:[#allocation5] sm:$0xff]
    %v48 = vld [vmem:[#allocation5 + $0x8] sm:$0xff]
    %v49 = vld [vmem:[#allocation5 + $0x10] sm:$0xff]
    %v50 = vld [vmem:[#allocation5 + $0x18] sm:$0xff]
    %v51 = vld [vmem:[#allocation5 + $0x20] sm:$0xff]
    %v52 = vld [vmem:[#allocation5 + $0x28] sm:$0xff]
    %v53 = vld [vmem:[#allocation5 + $0x30] sm:$0xff]
    %v54 = vld [vmem:[#allocation5 + $0x38] sm:$0xff]
    %v55 = vld [vmem:[#allocation5 + $0x40] sm:$0xff]
    %v56 = vld [vmem:[#allocation5 + $0x48] sm:$0xff]
    %v57 = vld [vmem:[#allocation5 + $0x50] sm:$0xff]
    %v58 = vld [vmem:[#allocation5 + $0x58] sm:$0xff]
    %v59 = vld [vmem:[#allocation5 + $0x60] sm:$0xff]
    %v60 = vld [vmem:[#allocation5 + $0x68] sm:$0xff]
    %v61 = vld [vmem:[#allocation5 + $0x70] sm:$0xff]
    %v62 = vld [vmem:[#allocation5 + $0x78] sm:$0xff]
    %v63 = vld [vmem:[%s2] sm:$0x1]
    %v65 = vlaneseq
    %v66 = vshrl.u32 %v65, 7
    %v67 = vsub.s32 0, %v66
    %v68 = vrot.slane %v63, %v67
    %70 = vmatprep.subr.mxu0 0.0
    %71 = vmatpush1.msra.mxu0 %v47
    %72 = vmatprep.subr.mxu0 0.0
    %73 = vmatpush1.msra.mxu0 %v48
    %74 = vmatprep.subr.mxu0 0.0
    %75 = vmatpush1.msra.mxu0 %v49
    %76 = vmatprep.subr.mxu0 0.0
    %77 = vmatpush1.msra.mxu0 %v50
    %78 = vmatprep.subr.mxu0 0.0
    %79 = vmatpush1.msra.mxu0 %v51
    %80 = vmatprep.subr.mxu0 0.0
    %81 = vmatpush1.msra.mxu0 %v52
    %82 = vmatprep.subr.mxu0 0.0
    %83 = vmatpush1.msra.mxu0 %v53
    %84 = vmatprep.subr.mxu0 0.0
    %85 = vmatpush1.msra.mxu0 %v54
    %86 = vmatprep.subr.mxu0 0.0
    %87 = vmatpush1.msra.mxu0 %v55
    %88 = vmatprep.subr.mxu0 0.0
    %89 = vmatpush1.msra.mxu0 %v56
    %90 = vmatprep.subr.mxu0 0.0
    %91 = vmatpush1.msra.mxu0 %v57
    %92 = vmatprep.subr.mxu0 0.0
    %93 = vmatpush1.msra.mxu0 %v58
    %94 = vmatprep.subr.mxu0 0.0
    %95 = vmatpush1.msra.mxu0 %v59
    %96 = vmatprep.subr.mxu0 0.0
    %97 = vmatpush1.msra.mxu0 %v60
    %98 = vmatprep.subr.mxu0 0.0
    %99 = vmatpush1.msra.mxu0 %v61
    %100 = vmatprep.subr.mxu0 0.0
    %101 = vmatpush1.msra.mxu0 %v62
    %102 = vmatprep.subr.mxu0 0.0
    %103 = vmatpush1.msra.mxu0 0.0
    %104 = vmatprep.subr.mxu0 0.0
    %105 = vmatpush1.msra.mxu0 0.0
    %106 = vmatprep.subr.mxu0 0.0
    %107 = vmatpush1.msra.mxu0 0.0
    %108 = vmatprep.subr.mxu0 0.0
    %109 = vmatpush1.msra.mxu0 0.0
    %110 = vmatprep.subr.mxu0 0.0
    %111 = vmatpush1.msra.mxu0 0.0
    %112 = vmatprep.subr.mxu0 0.0
    %113 = vmatpush1.msra.mxu0 0.0
    %114 = vmatprep.subr.mxu0 0.0
    %115 = vmatpush1.msra.mxu0 0.0
    %116 = vmatprep.subr.mxu0 0.0
    %117 = vmatpush1.msra.mxu0 0.0
    %118 = vmatprep.subr.mxu0 0.0
    %119 = vmatpush1.msra.mxu0 0.0
    %120 = vmatprep.subr.mxu0 0.0
    %121 = vmatpush1.msra.mxu0 0.0
    %122 = vmatprep.subr.mxu0 0.0
    %123 = vmatpush1.msra.mxu0 0.0
    %124 = vmatprep.subr.mxu0 0.0
    %125 = vmatpush1.msra.mxu0 0.0
    %126 = vmatprep.subr.mxu0 0.0
    %127 = vmatpush1.msra.mxu0 0.0
    %128 = vmatprep.subr.mxu0 0.0
    %129 = vmatpush1.msra.mxu0 0.0
    %130 = vmatprep.subr.mxu0 0.0
    %131 = vmatpush1.msra.mxu0 0.0
    %132 = vmatprep.subr.mxu0 0.0
    %133 = vmatpush1.msra.mxu0 0.0
    %134 = vmatprep.mubr.f32.mxu0 0.0
    %135 = vmatmul.mubr.f32.gmra.mrb[0].mxu0 %v43
    %v136 = vpop.f32.mrb[0].mxu0
    %v137 = vadd.f32 %v68, %v136
    %v138 = vpop.f32.mrb[0].mxu0
    %139 = vmatprep.mubr.f32.mxu0 0.0
    %140 = vmatmul.mubr.f32.gmra.mrb[0].mxu0 %v44
    %v141 = vpop.f32.mrb[0].mxu0
    %v142 = vadd.f32 %v68, %v141
    %v143 = vpop.f32.mrb[0].mxu0
    %144 = vmatprep.mubr.f32.mxu0 0.0
    %145 = vmatmul.mubr.f32.gmra.mrb[0].mxu0 %v45
    %v146 = vpop.f32.mrb[0].mxu0
    %v147 = vadd.f32 %v68, %v146
    %v148 = vpop.f32.mrb[0].mxu0
    %149 = vmatprep.mubr.f32.mxu0 0.0
    %150 = vmatmul.mubr.f32.gmra.mrb[0].mxu0 %v46
    %v151 = vpop.f32.mrb[0].mxu0
    %v152 = vadd.f32 %v68, %v151
    %v153 = vpop.f32.mrb[0].mxu0
    %154 = vdwg.mxu0
    %155 = vst [vmem:[#allocation7] sm:$0xff] %v137
    %156 = vst [vmem:[#allocation7 + $0x8] sm:$0xff] %v142
    %157 = vst [vmem:[#allocation7 + $0x10] sm:$0xff] %v147
    %158 = vst [vmem:[#allocation7 + $0x18] sm:$0xff] %v152
    // Predicated region
    $region22: #{tpu_custom_call.1} parent=1 // pred_check
      _
    $region23: #{tpu_custom_call.1} parent=1 // pred_check_branch
      %160 = sbr.rel (0) target = $region25
    $region24: #{tpu_custom_call.1} parent=1 // pred_region
      %s162 = ssub.s32 512, 512
      %163 = vsyncadd [#allocation4], %s162
      %s164 = sshll.u32 [#allocation7], 4
      %s165 = int_to_ptr.vmem [resolvable:$true] %s164
      %170 = dma.vmem_to_hbm [thread:$0]  %s165, 512, %s3, [#allocation4], 128, 128, 8
    $region25: #{tpu_custom_call.1} parent=1 // pred_fallthru
      _
    // Predicated region
    $region26: #{tpu_custom_call.1} parent=1 // pred_check
      _
    $region27: #{tpu_custom_call.1} parent=1 // pred_check_branch
      %172 = sbr.rel (0) target = $region29
    $region28: #{tpu_custom_call.1} parent=1 // pred_region
      %173 = dma.done [#allocation4], 512
    $region29: #{tpu_custom_call.1} parent=1 // pred_fallthru
      _
    %174 = vsyncpa [#allocation3], 1
    %175 = vsyncpa [#allocation6], 1
    %176 = vsyncpa [#allocation4], 1

</llo_original>
